<compile_context>
chip_gen: v7x
topology: tpu7x:2x2x1
jax: 0.10.0
libtpu: 0.0.40
codegen_flags: <defaults>
</compile_context>

<pallas_src>
import functools

import jax
import jax.numpy as jnp
from jax.experimental import pallas as pl
from jax.experimental.pallas import tpu as pltpu


# ----------------------------------------------------------------------------
# Fused kernel: 4x CD_encoder + DIFM + MLP classifier (one grid step)
# ----------------------------------------------------------------------------
def cd_net_kernel(xa_ref, xba_ref, xb_ref, xab_ref,
                  wenc_ref, benc_ref,
                  wdif_ref, bdif_ref,
                  w1_ref, b1_ref, w2_ref, b2_ref,
                  pred_ref, *, batch, cmid):
    """All refs are full-array VMEM blocks (grid=(1,)).

    x*_ref:   (B*Cin, HW) bf16, channel-first, lane-dense (pure reshape of NCHW).
    wenc_ref: (2*B*cmid, 2*B*Cin) bf16 block-diag weight; rows ordered
              [enc_a applied to each b ; enc_b applied to each b].
    wdif_ref: (B*cmid, 2*B*cmid) bf16 block weight implementing
              difm_w @ concat([d1_b, d2_b]) per batch element.
    Biases / MLP head weights: f32.  pred_ref: (num_classes, B) f32.
    """
    # Sublane-aligned concat (row boundaries are multiples of the 8-row /
    # 16-row sublane tile) -> free vreg placement, no HBM traffic.
    x1 = jnp.concatenate([xa_ref[...], xb_ref[...]], axis=0)    # [x_a ; x_b ]
    x2 = jnp.concatenate([xba_ref[...], xab_ref[...]], axis=0)  # [x_ba; x_ab]

    wenc = wenc_ref[...]
    benc = benc_ref[...]
    # One MXU push per input set covers all 2*B encoder applications.
    c1 = jnp.maximum(
        jnp.dot(wenc, x1, preferred_element_type=jnp.float32) + benc, 0.0)
    c2 = jnp.maximum(
        jnp.dot(wenc, x2, preferred_element_type=jnp.float32) + benc, 0.0)
    # c1 rows: [c_a per b ; c_b per b]   c2 rows: [c_ba per b ; c_ab per b]

    # DIFM abs-diff fusion; d is already the channel-concat [d1_b ; d2_b]
    # layout the block weight expects -> single matmul, no lane splits.
    d = jnp.abs(c1 - c2)                                          # f32
    f = jnp.maximum(
        jnp.dot(wdif_ref[...], d.astype(wdif_ref.dtype),
                preferred_element_type=jnp.float32) + bdif_ref[...], 0.0)
    # Global average pool over the spatial (lane) axis.
    m = jnp.mean(f, axis=1, keepdims=True)                        # (B*cmid, 1)

    # Re-pack per-batch pooled vectors as channel-first columns (16, B).
    pooled = jnp.concatenate(
        [m[b * cmid:(b + 1) * cmid, :] for b in range(batch)], axis=1)

    # MLP classifier head (f32): Linear(16,32)+ReLU+Linear(32,2).
    h = jnp.maximum(
        jnp.dot(w1_ref[...], pooled, preferred_element_type=jnp.float32)
        + b1_ref[...], 0.0)
    pred_ref[...] = (jnp.dot(w2_ref[...], h,
                             preferred_element_type=jnp.float32) + b2_ref[...])


# ----------------------------------------------------------------------------
# Parameters (PyTorch (out, in) convention)
# ----------------------------------------------------------------------------
def init_params(key):
    ks = jax.random.split(key, 6)
    s = 0.1
    return {
        "enc_a_w": s * jax.random.normal(ks[0], (16, 32), jnp.float32),
        "enc_a_b": jnp.zeros((16,), jnp.float32),
        "enc_b_w": s * jax.random.normal(ks[1], (16, 32), jnp.float32),
        "enc_b_b": jnp.zeros((16,), jnp.float32),
        "difm_w": s * jax.random.normal(ks[2], (16, 32), jnp.float32),
        "difm_b": jnp.zeros((16,), jnp.float32),
        "mlp_w1": s * jax.random.normal(ks[3], (32, 16), jnp.float32),
        "mlp_b1": jnp.zeros((32,), jnp.float32),
        "mlp_w2": s * jax.random.normal(ks[4], (2, 32), jnp.float32),
        "mlp_b2": jnp.zeros((2,), jnp.float32),
    }


# ----------------------------------------------------------------------------
# CD_Net forward
# ----------------------------------------------------------------------------
def cd_net_forward(params, x_a, x_b, x_ab, x_ba):
    B, Cin, H, W = x_a.shape
    HW = H * W
    Cmid = params["enc_a_w"].shape[0]     # 16
    Hd = params["mlp_w1"].shape[0]        # 32
    K = params["mlp_w2"].shape[0]         # 2

    mm_dtype = jnp.bfloat16
    f32 = jnp.float32

    # Pure row-major reshape (no HBM pass) + bf16 matmul-operand cast (halves
    # input DMA bytes).  In a real pipeline feed bf16 activations directly and
    # this cast is a no-op.
    flat = lambda x: x.reshape(B * Cin, HW).astype(mm_dtype)
    xa, xb, xab, xba = flat(x_a), flat(x_b), flat(x_ab), flat(x_ba)

    eyeB = jnp.eye(B, dtype=f32)
    zblk = jnp.zeros((B * Cmid, B * Cin), f32)
    # Block-diagonal encoder weight: rows [enc_a per b ; enc_b per b].
    wenc = jnp.block([[jnp.kron(eyeB, params["enc_a_w"]), zblk],
                      [zblk, jnp.kron(eyeB, params["enc_b_w"])]]).astype(mm_dtype)
    benc = jnp.concatenate([jnp.tile(params["enc_a_b"], B),
                            jnp.tile(params["enc_b_b"], B)]).reshape(-1, 1)

    # DIFM block weight: per-b  difm_w @ [d1_b ; d2_b]  with d laid out as
    # [d1 per b ; d2 per b] rows.
    wd1 = params["difm_w"][:, :Cmid]
    wd2 = params["difm_w"][:, Cmid:]
    wdif = jnp.concatenate([jnp.kron(eyeB, wd1), jnp.kron(eyeB, wd2)],
                           axis=1).astype(mm_dtype)
    bdif = jnp.tile(params["difm_b"], B).reshape(-1, 1)

    col = lambda v: v.reshape(-1, 1)

    def full(shape):
        return pl.BlockSpec(shape, lambda i, _n=len(shape): (0,) * _n)

    flops = (2 * 2 * (2 * B * Cmid) * (2 * B * Cin) * HW      # 2 encoder matmuls
             + 2 * (B * Cmid) * (2 * B * Cmid) * HW            # DIFM matmul
             + 2 * Hd * Cmid * B + 2 * K * Hd * B)             # MLP head
    bytes_accessed = (4 * B * Cin * HW * 2                     # bf16 inputs
                      + (wenc.size + wdif.size) * 2
                      + (benc.size + bdif.size) * 4
                      + (Hd * Cmid + Hd + K * Hd + K) * 4
                      + K * B * 4)

    pred_cf = pl.pallas_call(
        functools.partial(cd_net_kernel, batch=B, cmid=Cmid),
        out_shape=jax.ShapeDtypeStruct((K, B), jnp.float32),
        grid=(1,),
        in_specs=[
            full((B * Cin, HW)), full((B * Cin, HW)),
            full((B * Cin, HW)), full((B * Cin, HW)),
            full((2 * B * Cmid, 2 * B * Cin)), full((2 * B * Cmid, 1)),
            full((B * Cmid, 2 * B * Cmid)), full((B * Cmid, 1)),
            full((Hd, Cmid)), full((Hd, 1)),
            full((K, Hd)), full((K, 1)),
        ],
        out_specs=full((K, B)),
        compiler_params=pltpu.CompilerParams(
            dimension_semantics=("arbitrary",)),
        cost_estimate=pl.CostEstimate(flops=flops, transcendentals=0,
                                      bytes_accessed=bytes_accessed),
    )(xa, xba, xb, xab,
      wenc, benc, wdif, bdif,
      params["mlp_w1"], col(params["mlp_b1"]),
      params["mlp_w2"], col(params["mlp_b2"]))

    pred = pred_cf.T                       # (B, num_classes)
    train_pred = jnp.argmax(pred, axis=1)  # torch.argmax(pred, dim=1)
    return pred, train_pred


if __name__ == "__main__":
    key = jax.random.PRNGKey(0)
    kxa, kxb, kxab, kxba = jax.random.split(key, 4)
    B, Cin, H, W = 2, 32, 8, 8  # NCHW, 32 channels per CD_encoder(32, 16)
    x_a = jax.random.normal(kxa, (B, Cin, H, W), jnp.float32)
    x_b = jax.random.normal(kxb, (B, Cin, H, W), jnp.float32)
    x_ab = jax.random.normal(kxab, (B, Cin, H, W), jnp.float32)
    x_ba = jax.random.normal(kxba, (B, Cin, H, W), jnp.float32)

    params = init_params(jax.random.PRNGKey(42))
    pred, train_pred = jax.jit(cd_net_forward)(params, x_a, x_b, x_ab, x_ba)
    jax.block_until_ready((pred, train_pred))
    assert pred.shape == (B, 2) and train_pred.shape == (B,)
    print("KERNEL_OK")
</pallas_src>

<mosaic_0001>
module attributes {stable_mosaic.version = 11 : i64} {
  func.func @cd_net_kernel(%arg0: i32, %arg1: memref<64x64xbf16, #tpu.memory_space<vmem>>, %arg2: memref<64x64xbf16, #tpu.memory_space<vmem>>, %arg3: memref<64x64xbf16, #tpu.memory_space<vmem>>, %arg4: memref<64x64xbf16, #tpu.memory_space<vmem>>, %arg5: memref<64x128xbf16, #tpu.memory_space<vmem>>, %arg6: memref<64x1xf32, #tpu.memory_space<vmem>>, %arg7: memref<32x64xbf16, #tpu.memory_space<vmem>>, %arg8: memref<32x1xf32, #tpu.memory_space<vmem>>, %arg9: memref<32x16xf32, #tpu.memory_space<vmem>>, %arg10: memref<32x1xf32, #tpu.memory_space<vmem>>, %arg11: memref<2x32xf32, #tpu.memory_space<vmem>>, %arg12: memref<2x1xf32, #tpu.memory_space<vmem>>, %arg13: memref<2x2xf32, #tpu.memory_space<vmem>>) attributes {dimension_semantics = [#tpu.dimension_semantics<arbitrary>], iteration_bounds = array<i64: 1>, scalar_prefetch = 0 : i64, scratch_operands = 0 : i64, tpu.core_type = #tpu.core_type<tc>, window_params = [{pipeline_mode = #tpu.pipeline_mode<synchronous>, transform_indices = @transform_0, window_bounds = array<i64: 64, 64>}, {pipeline_mode = #tpu.pipeline_mode<synchronous>, transform_indices = @transform_1, window_bounds = array<i64: 64, 64>}, {pipeline_mode = #tpu.pipeline_mode<synchronous>, transform_indices = @transform_2, window_bounds = array<i64: 64, 64>}, {pipeline_mode = #tpu.pipeline_mode<synchronous>, transform_indices = @transform_3, window_bounds = array<i64: 64, 64>}, {pipeline_mode = #tpu.pipeline_mode<synchronous>, transform_indices = @transform_4, window_bounds = array<i64: 64, 128>}, {pipeline_mode = #tpu.pipeline_mode<synchronous>, transform_indices = @transform_5, window_bounds = array<i64: 64, 1>}, {pipeline_mode = #tpu.pipeline_mode<synchronous>, transform_indices = @transform_6, window_bounds = array<i64: 32, 64>}, {pipeline_mode = #tpu.pipeline_mode<synchronous>, transform_indices = @transform_7, window_bounds = array<i64: 32, 1>}, {pipeline_mode = #tpu.pipeline_mode<synchronous>, transform_indices = @transform_8, window_bounds = array<i64: 32, 16>}, {pipeline_mode = #tpu.pipeline_mode<synchronous>, transform_indices = @transform_9, window_bounds = array<i64: 32, 1>}, {pipeline_mode = #tpu.pipeline_mode<synchronous>, transform_indices = @transform_10, window_bounds = array<i64: 2, 32>}, {pipeline_mode = #tpu.pipeline_mode<synchronous>, transform_indices = @transform_11, window_bounds = array<i64: 2, 1>}, {pipeline_mode = #tpu.pipeline_mode<synchronous>, transform_indices = @transform_12, window_bounds = array<i64: 2, 2>}]} {
    %c0 = arith.constant 0 : index
    %c0_0 = arith.constant 0 : index
    %0 = vector.load %arg1[%c0, %c0_0] : memref<64x64xbf16, #tpu.memory_space<vmem>>, vector<64x64xbf16>
    %c0_1 = arith.constant 0 : index
    %c0_2 = arith.constant 0 : index
    %1 = vector.load %arg3[%c0_1, %c0_2] : memref<64x64xbf16, #tpu.memory_space<vmem>>, vector<64x64xbf16>
    %2 = tpu.concatenate %0, %1 in 0 : vector<64x64xbf16>, vector<64x64xbf16> -> vector<128x64xbf16>
    %c0_3 = arith.constant 0 : index
    %c0_4 = arith.constant 0 : index
    %3 = vector.load %arg2[%c0_3, %c0_4] : memref<64x64xbf16, #tpu.memory_space<vmem>>, vector<64x64xbf16>
    %c0_5 = arith.constant 0 : index
    %c0_6 = arith.constant 0 : index
    %4 = vector.load %arg4[%c0_5, %c0_6] : memref<64x64xbf16, #tpu.memory_space<vmem>>, vector<64x64xbf16>
    %5 = tpu.concatenate %3, %4 in 0 : vector<64x64xbf16>, vector<64x64xbf16> -> vector<128x64xbf16>
    %c0_7 = arith.constant 0 : index
    %c0_8 = arith.constant 0 : index
    %6 = vector.load %arg5[%c0_7, %c0_8] : memref<64x128xbf16, #tpu.memory_space<vmem>>, vector<64x128xbf16>
    %c0_9 = arith.constant 0 : index
    %c0_10 = arith.constant 0 : index
    %7 = vector.load %arg6[%c0_9, %c0_10] : memref<64x1xf32, #tpu.memory_space<vmem>>, vector<64x1xf32>
    %cst = arith.constant dense<0.000000e+00> : vector<64x64xf32>
    %8 = tpu.matmul %6, %2, %cst {dimension_numbers = #tpu.dot_dimension_numbers<[1], [0], [0], [1], [0, 0, 1, 1], [], []>} : vector<64x128xbf16>, vector<128x64xbf16>, vector<64x64xf32> -> vector<64x64xf32>
    %9 = vector.broadcast %7 : vector<64x1xf32> to vector<64x64xf32>
    %10 = arith.addf %8, %9 : vector<64x64xf32>
    %cst_11 = arith.constant 0.000000e+00 : f32
    %11 = vector.broadcast %cst_11 : f32 to vector<64x64xf32>
    %12 = arith.maximumf %10, %11 : vector<64x64xf32>
    %cst_12 = arith.constant dense<0.000000e+00> : vector<64x64xf32>
    %13 = tpu.matmul %6, %5, %cst_12 {dimension_numbers = #tpu.dot_dimension_numbers<[1], [0], [0], [1], [0, 0, 1, 1], [], []>} : vector<64x128xbf16>, vector<128x64xbf16>, vector<64x64xf32> -> vector<64x64xf32>
    %14 = vector.broadcast %7 : vector<64x1xf32> to vector<64x64xf32>
    %15 = arith.addf %13, %14 : vector<64x64xf32>
    %cst_13 = arith.constant 0.000000e+00 : f32
    %16 = vector.broadcast %cst_13 : f32 to vector<64x64xf32>
    %17 = arith.maximumf %15, %16 : vector<64x64xf32>
    %18 = arith.subf %12, %17 : vector<64x64xf32>
    %19 = math.absf %18 : vector<64x64xf32>
    %c0_14 = arith.constant 0 : index
    %c0_15 = arith.constant 0 : index
    %20 = vector.load %arg7[%c0_14, %c0_15] : memref<32x64xbf16, #tpu.memory_space<vmem>>, vector<32x64xbf16>
    %21 = arith.truncf %19 : vector<64x64xf32> to vector<64x64xbf16>
    %cst_16 = arith.constant dense<0.000000e+00> : vector<32x64xf32>
    %22 = tpu.matmul %20, %21, %cst_16 {dimension_numbers = #tpu.dot_dimension_numbers<[1], [0], [0], [1], [0, 0, 1, 1], [], []>} : vector<32x64xbf16>, vector<64x64xbf16>, vector<32x64xf32> -> vector<32x64xf32>
    %c0_17 = arith.constant 0 : index
    %c0_18 = arith.constant 0 : index
    %23 = vector.load %arg8[%c0_17, %c0_18] : memref<32x1xf32, #tpu.memory_space<vmem>>, vector<32x1xf32>
    %24 = vector.broadcast %23 : vector<32x1xf32> to vector<32x64xf32>
    %25 = arith.addf %22, %24 : vector<32x64xf32>
    %cst_19 = arith.constant 0.000000e+00 : f32
    %26 = vector.broadcast %cst_19 : f32 to vector<32x64xf32>
    %27 = arith.maximumf %25, %26 : vector<32x64xf32>
    %cst_20 = arith.constant dense<0.000000e+00> : vector<32xf32>
    %28 = vector.multi_reduction <add>, %27, %cst_20 [1] : vector<32x64xf32> to vector<32xf32>
    %29 = vector.shape_cast %28 : vector<32xf32> to vector<32x1xf32>
    %cst_21 = arith.constant 6.400000e+01 : f32
    %30 = vector.broadcast %cst_21 : f32 to vector<32x1xf32>
    %31 = arith.divf %29, %30 : vector<32x1xf32>
    %32 = vector.extract_strided_slice %31 {offsets = [0, 0], sizes = [16, 1], strides = [1, 1]} : vector<32x1xf32> to vector<16x1xf32>
    %33 = vector.extract_strided_slice %31 {offsets = [16, 0], sizes = [16, 1], strides = [1, 1]} : vector<32x1xf32> to vector<16x1xf32>
    %34 = tpu.concatenate %32, %33 in 1 : vector<16x1xf32>, vector<16x1xf32> -> vector<16x2xf32>
    %c0_22 = arith.constant 0 : index
    %c0_23 = arith.constant 0 : index
    %35 = vector.load %arg9[%c0_22, %c0_23] : memref<32x16xf32, #tpu.memory_space<vmem>>, vector<32x16xf32>
    %cst_24 = arith.constant dense<0.000000e+00> : vector<32x2xf32>
    %36 = tpu.matmul %35, %34, %cst_24 {dimension_numbers = #tpu.dot_dimension_numbers<[1], [0], [0], [1], [0, 0, 1, 1], [], []>} : vector<32x16xf32>, vector<16x2xf32>, vector<32x2xf32> -> vector<32x2xf32>
    %c0_25 = arith.constant 0 : index
    %c0_26 = arith.constant 0 : index
    %37 = vector.load %arg10[%c0_25, %c0_26] : memref<32x1xf32, #tpu.memory_space<vmem>>, vector<32x1xf32>
    %38 = vector.broadcast %37 : vector<32x1xf32> to vector<32x2xf32>
    %39 = arith.addf %36, %38 : vector<32x2xf32>
    %cst_27 = arith.constant 0.000000e+00 : f32
    %40 = vector.broadcast %cst_27 : f32 to vector<32x2xf32>
    %41 = arith.maximumf %39, %40 : vector<32x2xf32>
    %c0_28 = arith.constant 0 : index
    %c0_29 = arith.constant 0 : index
    %42 = vector.load %arg11[%c0_28, %c0_29] : memref<2x32xf32, #tpu.memory_space<vmem>>, vector<2x32xf32>
    %cst_30 = arith.constant dense<0.000000e+00> : vector<2x2xf32>
    %43 = tpu.matmul %42, %41, %cst_30 {dimension_numbers = #tpu.dot_dimension_numbers<[1], [0], [0], [1], [0, 0, 1, 1], [], []>} : vector<2x32xf32>, vector<32x2xf32>, vector<2x2xf32> -> vector<2x2xf32>
    %c0_31 = arith.constant 0 : index
    %c0_32 = arith.constant 0 : index
    %44 = vector.load %arg12[%c0_31, %c0_32] : memref<2x1xf32, #tpu.memory_space<vmem>>, vector<2x1xf32>
    %45 = vector.broadcast %44 : vector<2x1xf32> to vector<2x2xf32>
    %46 = arith.addf %43, %45 : vector<2x2xf32>
    %c0_33 = arith.constant 0 : index
    %c0_34 = arith.constant 0 : index
    %47 = vector.load %arg13[%c0_33, %c0_34] : memref<2x2xf32, #tpu.memory_space<vmem>>, vector<2x2xf32>
    tpu.vector_store %arg13[%c0_33, %c0_34], %46 {strides = array<i32>} : memref<2x2xf32, #tpu.memory_space<vmem>>, vector<2x2xf32>,
    return
  }
  func.func @transform_0(%arg0: i32) -> (i32, i32) {
    %c0_i32 = arith.constant 0 : i32
    %c0_i32_0 = arith.constant 0 : i32
    %c0_i32_1 = arith.constant 0 : i32
    return %c0_i32, %c0_i32_0 : i32, i32
  }
  func.func @transform_1(%arg0: i32) -> (i32, i32) {
    %c0_i32 = arith.constant 0 : i32
    %c0_i32_0 = arith.constant 0 : i32
    %c0_i32_1 = arith.constant 0 : i32
    return %c0_i32, %c0_i32_0 : i32, i32
  }
  func.func @transform_2(%arg0: i32) -> (i32, i32) {
    %c0_i32 = arith.constant 0 : i32
    %c0_i32_0 = arith.constant 0 : i32
    %c0_i32_1 = arith.constant 0 : i32
    return %c0_i32, %c0_i32_0 : i32, i32
  }
  func.func @transform_3(%arg0: i32) -> (i32, i32) {
    %c0_i32 = arith.constant 0 : i32
    %c0_i32_0 = arith.constant 0 : i32
    %c0_i32_1 = arith.constant 0 : i32
    return %c0_i32, %c0_i32_0 : i32, i32
  }
  func.func @transform_4(%arg0: i32) -> (i32, i32) {
    %c0_i32 = arith.constant 0 : i32
    %c0_i32_0 = arith.constant 0 : i32
    %c0_i32_1 = arith.constant 0 : i32
    return %c0_i32, %c0_i32_0 : i32, i32
  }
  func.func @transform_5(%arg0: i32) -> (i32, i32) {
    %c0_i32 = arith.constant 0 : i32
    %c0_i32_0 = arith.constant 0 : i32
    %c0_i32_1 = arith.constant 0 : i32
    return %c0_i32, %c0_i32_0 : i32, i32
  }
  func.func @transform_6(%arg0: i32) -> (i32, i32) {
    %c0_i32 = arith.constant 0 : i32
    %c0_i32_0 = arith.constant 0 : i32
    %c0_i32_1 = arith.constant 0 : i32
    return %c0_i32, %c0_i32_0 : i32, i32
  }
  func.func @transform_7(%arg0: i32) -> (i32, i32) {
    %c0_i32 = arith.constant 0 : i32
    %c0_i32_0 = arith.constant 0 : i32
    %c0_i32_1 = arith.constant 0 : i32
    return %c0_i32, %c0_i32_0 : i32, i32
  }
  func.func @transform_8(%arg0: i32) -> (i32, i32) {
    %c0_i32 = arith.constant 0 : i32
    %c0_i32_0 = arith.constant 0 : i32
    %c0_i32_1 = arith.constant 0 : i32
    return %c0_i32, %c0_i32_0 : i32, i32
  }
  func.func @transform_9(%arg0: i32) -> (i32, i32) {
    %c0_i32 = arith.constant 0 : i32
    %c0_i32_0 = arith.constant 0 : i32
    %c0_i32_1 = arith.constant 0 : i32
    return %c0_i32, %c0_i32_0 : i32, i32
  }
  func.func @transform_10(%arg0: i32) -> (i32, i32) {
    %c0_i32 = arith.constant 0 : i32
    %c0_i32_0 = arith.constant 0 : i32
    %c0_i32_1 = arith.constant 0 : i32
    return %c0_i32, %c0_i32_0 : i32, i32
  }
  func.func @transform_11(%arg0: i32) -> (i32, i32) {
    %c0_i32 = arith.constant 0 : i32
    %c0_i32_0 = arith.constant 0 : i32
    %c0_i32_1 = arith.constant 0 : i32
    return %c0_i32, %c0_i32_0 : i32, i32
  }
  func.func @transform_12(%arg0: i32) -> (i32, i32) {
    %c0_i32 = arith.constant 0 : i32
    %c0_i32_0 = arith.constant 0 : i32
    %c0_i32_1 = arith.constant 0 : i32
    return %c0_i32, %c0_i32_0 : i32, i32
  }
}

</mosaic_0001>

<llo_original>
// kernel: tile.18
$region0: #{tile.18}
  #allocation0 [shape = 's32[1]{0}', space=sflag, size = 0x4, scoped, tag = 'scoped memory for tile.18']
  %s0 = inlined_call_operand.vmem [shape: f32[16], index: 0, kind: input, shape index: {}]
  %s1 = inlined_call_operand.vmem [shape: f32[2,16], index: 1, kind: output, shape index: {}]
  // Predicated region
  $region2: #{tile.18} parent=0 // pred_check
    _
  $region3: #{tile.18} parent=0 // pred_check_branch
    %3 = sbr.rel (0) target = $region5
  $region4: #{tile.18} parent=0 // pred_region
    _
  $region5: #{tile.18} parent=0 // pred_fallthru
    _
  %v4 = vld [vmem:[%s0] ss:$0 sm:$0xff]
  %5 = vst [vmem:[%s1] sm:$0x3] %v4

// kernel: tile.19
$region0: #{tile.19}
  %s0 = inlined_call_operand.vmem [shape: f32[2,16], index: 0, kind: input, shape index: {}]
  %s1 = inlined_call_operand.vmem [shape: f32[32], index: 1, kind: output, shape index: {}]
  $region1: #{tile.19} parent=0
    #allocation0 [shape = 'u8[4096]{0}', space=vmem, size = 0x1000, scoped, tag = 'scoped mem for output reshape']
    #allocation1 [shape = 'u8[4096]{0}', space=vmem, size = 0x1000, scoped, tag = 'scoped mem for input reshape']
    %s3 = sshllo.u32 0, 2
    %v4 = vld [vmem:[%s0] sm:%s3]
    %5 = vst [vmem:[#allocation1] sm:%s3] %v4
    %v6 = vld [vmem:[#allocation1] sm:$0x1]
    %vm7 = vcmask 130048
    %8 = vst.msk [vmem:[#allocation0] sm:$0x1] %vm7, %v6
    %s9 = scalar_lea.vmem [#allocation1], 1
    %v10 = vld [vmem:[%s9] sm:$0x1]
    %11 = vrot.lane.b32.xlu0 %v10, 16
    %v12 = vpop.permute.xlu0 %11
    %vm13 = vcmask 261248
    %14 = vst.msk [vmem:[#allocation0] sm:$0x1] %vm13, %v12
    %s16 = sshllo.u32 0, 1
    %v18 = vld [vmem:[#allocation0] sm:%s16]
    %s19 = sshllo.u32 0, 1
    %20 = vst [vmem:[%s1] sm:%s19] %v18

// kernel: tile.0
$region0: #{tile.0}
  %s0 = inlined_call_operand.vmem [shape: f32[2,16], index: 0, kind: input, shape index: {}]
  %s1 = inlined_call_operand.vmem [shape: f32[32,1], index: 1, kind: output, shape index: {}]
  $region1: #{tile.0} parent=0
    #allocation0 [shape = 'u8[4096]{0}', space=vmem, size = 0x1000, scoped, tag = 'scoped mem for input reshape']
    %s3 = sshllo.u32 0, 2
    %v4 = vld [vmem:[%s0] sm:%s3]
    %5 = vst [vmem:[#allocation0] sm:%s3] %v4
    %v6 = vld [vmem:[#allocation0] sm:$0x3]
    %vm7 = vcmask 7168
    %8 = vst.msk [vmem:[%s1] ss:$16 sm:$0x3] %vm7, %v6
    %v9 = vld [vmem:[#allocation0] sm:$0x3]
    %10 = vrot.lane.b32.xlu0 %v9, 127
    %v11 = vpop.permute.xlu0 %10
    %vm12 = vcmask 7168
    %s13 = scalar_lea.vmem %s1, 1
    %14 = vst.msk [vmem:[%s13] ss:$16 sm:$0x3] %vm12, %v11
    %v15 = vld [vmem:[#allocation0] sm:$0x3]
    %16 = vrot.lane.b32.xlu0 %v15, 126
    %v17 = vpop.permute.xlu0 %16
    %vm18 = vcmask 7168
    %s19 = scalar_lea.vmem %s1, 2
    %20 = vst.msk [vmem:[%s19] ss:$16 sm:$0x3] %vm18, %v17
    %v21 = vld [vmem:[#allocation0] sm:$0x3]
    %22 = vrot.lane.b32.xlu0 %v21, 125
    %v23 = vpop.permute.xlu0 %22
    %vm24 = vcmask 7168
    %s25 = scalar_lea.vmem %s1, 3
    %26 = vst.msk [vmem:[%s25] ss:$16 sm:$0x3] %vm24, %v23
    %v27 = vld [vmem:[#allocation0] sm:$0x3]
    %28 = vrot.lane.b32.xlu0 %v27, 124
    %v29 = vpop.permute.xlu0 %28
    %vm30 = vcmask 7168
    %s31 = scalar_lea.vmem %s1, 4
    %32 = vst.msk [vmem:[%s31] ss:$16 sm:$0x3] %vm30, %v29
    %v33 = vld [vmem:[#allocation0] sm:$0x3]
    %34 = vrot.lane.b32.xlu0 %v33, 123
    %v35 = vpop.permute.xlu0 %34
    %vm36 = vcmask 7168
    %s37 = scalar_lea.vmem %s1, 5
    %38 = vst.msk [vmem:[%s37] ss:$16 sm:$0x3] %vm36, %v35
    %v39 = vld [vmem:[#allocation0] sm:$0x3]
    %40 = vrot.lane.b32.xlu0 %v39, 122
    %v41 = vpop.permute.xlu0 %40
    %vm42 = vcmask 7168
    %s43 = scalar_lea.vmem %s1, 6
    %44 = vst.msk [vmem:[%s43] ss:$16 sm:$0x3] %vm42, %v41
    %v45 = vld [vmem:[#allocation0] sm:$0x3]
    %46 = vrot.lane.b32.xlu0 %v45, 121
    %v47 = vpop.permute.xlu0 %46
    %vm48 = vcmask 7168
    %s49 = scalar_lea.vmem %s1, 7
    %50 = vst.msk [vmem:[%s49] ss:$16 sm:$0x3] %vm48, %v47
    %v51 = vld [vmem:[#allocation0] sm:$0x3]
    %52 = vrot.lane.b32.xlu0 %v51, 120
    %v53 = vpop.permute.xlu0 %52
    %vm54 = vcmask 7168
    %s55 = scalar_lea.vmem %s1, 8
    %56 = vst.msk [vmem:[%s55] ss:$16 sm:$0x3] %vm54, %v53
    %v57 = vld [vmem:[#allocation0] sm:$0x3]
    %58 = vrot.lane.b32.xlu0 %v57, 119
    %v59 = vpop.permute.xlu0 %58
    %vm60 = vcmask 7168
    %s61 = scalar_lea.vmem %s1, 9
    %62 = vst.msk [vmem:[%s61] ss:$16 sm:$0x3] %vm60, %v59
    %v63 = vld [vmem:[#allocation0] sm:$0x3]
    %64 = vrot.lane.b32.xlu0 %v63, 118
    %v65 = vpop.permute.xlu0 %64
    %vm66 = vcmask 7168
    %s67 = scalar_lea.vmem %s1, 10
    %68 = vst.msk [vmem:[%s67] ss:$16 sm:$0x3] %vm66, %v65
    %v69 = vld [vmem:[#allocation0] sm:$0x3]
    %70 = vrot.lane.b32.xlu0 %v69, 117
    %v71 = vpop.permute.xlu0 %70
    %vm72 = vcmask 7168
    %s73 = scalar_lea.vmem %s1, 11
    %74 = vst.msk [vmem:[%s73] ss:$16 sm:$0x3] %vm72, %v71
    %v75 = vld [vmem:[#allocation0] sm:$0x3]
    %76 = vrot.lane.b32.xlu0 %v75, 116
    %v77 = vpop.permute.xlu0 %76
    %vm78 = vcmask 7168
    %s79 = scalar_lea.vmem %s1, 12
    %80 = vst.msk [vmem:[%s79] ss:$16 sm:$0x3] %vm78, %v77
    %v81 = vld [vmem:[#allocation0] sm:$0x3]
    %82 = vrot.lane.b32.xlu0 %v81, 115
    %v83 = vpop.permute.xlu0 %82
    %vm84 = vcmask 7168
    %s85 = scalar_lea.vmem %s1, 13
    %86 = vst.msk [vmem:[%s85] ss:$16 sm:$0x3] %vm84, %v83
    %v87 = vld [vmem:[#allocation0] sm:$0x3]
    %88 = vrot.lane.b32.xlu0 %v87, 114
    %v89 = vpop.permute.xlu0 %88
    %vm90 = vcmask 7168
    %s91 = scalar_lea.vmem %s1, 14
    %92 = vst.msk [vmem:[%s91] ss:$16 sm:$0x3] %vm90, %v89
    %v93 = vld [vmem:[#allocation0] sm:$0x3]
    %94 = vrot.lane.b32.xlu0 %v93, 113
    %v95 = vpop.permute.xlu0 %94
    %vm96 = vcmask 7168
    %s97 = scalar_lea.vmem %s1, 15
    %98 = vst.msk [vmem:[%s97] ss:$16 sm:$0x3] %vm96, %v95

// kernel: cd_net_forward.1
$region0: #{cd_net_forward.1}
  #allocation0 [shape = 'u32[]', space=smem, size = 0x4, offset = 0x4, fixed_abs, tag = 'smem constant byte address 0x4 - core index']
  #allocation1 [shape = 'u32[144,128]{1,0:T(1,128)}', space=vmem, size = 0x12000, scoped, tag = 'internal scratch']
  %s0 = inlined_call_operand.vmem [shape: bf16[64,64], index: 0, kind: input, shape index: {}]
  %s1 = inlined_call_operand.vmem [shape: bf16[64,64], index: 1, kind: input, shape index: {}]
  %s2 = inlined_call_operand.vmem [shape: bf16[64,64], index: 2, kind: input, shape index: {}]
  %s3 = inlined_call_operand.vmem [shape: bf16[64,64], index: 3, kind: input, shape index: {}]
  %s4 = inlined_call_operand.vmem [shape: bf16[64,128], index: 4, kind: input, shape index: {}]
  %s5 = inlined_call_operand.vmem [shape: f32[64,1], index: 5, kind: input, shape index: {}]
  %s6 = inlined_call_operand.vmem [shape: bf16[32,64], index: 6, kind: input, shape index: {}]
  %s7 = inlined_call_operand.vmem [shape: f32[32,1], index: 7, kind: input, shape index: {}]
  %s8 = inlined_call_operand.vmem [shape: f32[32,16], index: 8, kind: input, shape index: {}]
  %s9 = inlined_call_operand.vmem [shape: f32[32,1], index: 9, kind: input, shape index: {}]
  %s10 = inlined_call_operand.vmem [shape: f32[2,32], index: 10, kind: input, shape index: {}]
  %s11 = inlined_call_operand.vmem [shape: f32[2,1], index: 11, kind: input, shape index: {}]
  %s12 = inlined_call_operand.vmem [shape: f32[2,2], index: 12, kind: output, shape index: {}]
  %s13 = sld [smem:[#allocation0]]
  $region58: #{cd_net_forward.1} parent=0
    _
  %s15 = ssub.s32 1, %s13
  %s16 = scalar_select 0, %s15, %s13
  // Predicated region
  $region2: #{cd_net_forward.1} parent=0 // pred_check
    _
  $region3: #{cd_net_forward.1} parent=0 // pred_check_branch
    %18 = sbr.rel (0) target = $region5
  $region4: #{cd_net_forward.1} parent=0 // pred_region
    _
  $region5: #{cd_net_forward.1} parent=0 // pred_fallthru
    _
  // Predicated region
  $region6: #{cd_net_forward.1} parent=0 // pred_check
    _
  $region7: #{cd_net_forward.1} parent=0 // pred_check_branch
    %20 = sbr.rel (0) target = $region9
  $region8: #{cd_net_forward.1} parent=0 // pred_region
    _
  $region9: #{cd_net_forward.1} parent=0 // pred_fallthru
    _
  // Predicated region
  $region10: #{cd_net_forward.1} parent=0 // pred_check
    _
  $region11: #{cd_net_forward.1} parent=0 // pred_check_branch
    %22 = sbr.rel (0) target = $region13
  $region12: #{cd_net_forward.1} parent=0 // pred_region
    _
  $region13: #{cd_net_forward.1} parent=0 // pred_fallthru
    _
  // Predicated region
  $region14: #{cd_net_forward.1} parent=0 // pred_check
    _
  $region15: #{cd_net_forward.1} parent=0 // pred_check_branch
    %24 = sbr.rel (0) target = $region17
  $region16: #{cd_net_forward.1} parent=0 // pred_region
    _
  $region17: #{cd_net_forward.1} parent=0 // pred_fallthru
    _
  // Predicated region
  $region18: #{cd_net_forward.1} parent=0 // pred_check
    _
  $region19: #{cd_net_forward.1} parent=0 // pred_check_branch
    %26 = sbr.rel (0) target = $region21
  $region20: #{cd_net_forward.1} parent=0 // pred_region
    _
  $region21: #{cd_net_forward.1} parent=0 // pred_fallthru
    _
  // Predicated region
  $region22: #{cd_net_forward.1} parent=0 // pred_check
    _
  $region23: #{cd_net_forward.1} parent=0 // pred_check_branch
    %28 = sbr.rel (0) target = $region25
  $region24: #{cd_net_forward.1} parent=0 // pred_region
    _
  $region25: #{cd_net_forward.1} parent=0 // pred_fallthru
    _
  // Predicated region
  $region26: #{cd_net_forward.1} parent=0 // pred_check
    _
  $region27: #{cd_net_forward.1} parent=0 // pred_check_branch
    %30 = sbr.rel (0) target = $region29
  $region28: #{cd_net_forward.1} parent=0 // pred_region
    _
  $region29: #{cd_net_forward.1} parent=0 // pred_fallthru
    _
  // Predicated region
  $region30: #{cd_net_forward.1} parent=0 // pred_check
    _
  $region31: #{cd_net_forward.1} parent=0 // pred_check_branch
    %32 = sbr.rel (0) target = $region33
  $region32: #{cd_net_forward.1} parent=0 // pred_region
    _
  $region33: #{cd_net_forward.1} parent=0 // pred_fallthru
    _
  // Predicated region
  $region34: #{cd_net_forward.1} parent=0 // pred_check
    _
  $region35: #{cd_net_forward.1} parent=0 // pred_check_branch
    %34 = sbr.rel (0) target = $region37
  $region36: #{cd_net_forward.1} parent=0 // pred_region
    _
  $region37: #{cd_net_forward.1} parent=0 // pred_fallthru
    _
  // Predicated region
  $region38: #{cd_net_forward.1} parent=0 // pred_check
    _
  $region39: #{cd_net_forward.1} parent=0 // pred_check_branch
    %36 = sbr.rel (0) target = $region41
  $region40: #{cd_net_forward.1} parent=0 // pred_region
    _
  $region41: #{cd_net_forward.1} parent=0 // pred_fallthru
    _
  // Predicated region
  $region42: #{cd_net_forward.1} parent=0 // pred_check
    _
  $region43: #{cd_net_forward.1} parent=0 // pred_check_branch
    %38 = sbr.rel (0) target = $region45
  $region44: #{cd_net_forward.1} parent=0 // pred_region
    _
  $region45: #{cd_net_forward.1} parent=0 // pred_fallthru
    _
  // Predicated region
  $region46: #{cd_net_forward.1} parent=0 // pred_check
    _
  $region47: #{cd_net_forward.1} parent=0 // pred_check_branch
    %40 = sbr.rel (0) target = $region49
  $region48: #{cd_net_forward.1} parent=0 // pred_region
    _
  $region49: #{cd_net_forward.1} parent=0 // pred_fallthru
    _
  %v42 = vld [vmem:[%s0] sm:$0xf]
  %v43 = vld [vmem:[%s0 + $0x4] sm:$0xf]
  %v44 = vld [vmem:[%s0 + $0x8] sm:$0xf]
  %v45 = vld [vmem:[%s0 + $0xc] sm:$0xf]
  %v46 = vld [vmem:[%s0 + $0x10] sm:$0xf]
  %v47 = vld [vmem:[%s0 + $0x14] sm:$0xf]
  %v48 = vld [vmem:[%s0 + $0x18] sm:$0xf]
  %v49 = vld [vmem:[%s0 + $0x1c] sm:$0xf]
  %v50 = vld [vmem:[%s2] sm:$0xf]
  %v51 = vld [vmem:[%s2 + $0x4] sm:$0xf]
  %v52 = vld [vmem:[%s2 + $0x8] sm:$0xf]
  %v53 = vld [vmem:[%s2 + $0xc] sm:$0xf]
  %v54 = vld [vmem:[%s2 + $0x10] sm:$0xf]
  %v55 = vld [vmem:[%s2 + $0x14] sm:$0xf]
  %v56 = vld [vmem:[%s2 + $0x18] sm:$0xf]
  %v57 = vld [vmem:[%s2 + $0x1c] sm:$0xf]
  %v66 = vunpack.c.l.b16 %v42
  %v67 = vunpack.c.l.b16 %v43
  %v68 = vunpack.c.l.b16 %v44
  %v69 = vunpack.c.l.b16 %v45
  %v70 = vunpack.c.l.b16 %v46
  %v71 = vunpack.c.l.b16 %v47
  %v72 = vunpack.c.l.b16 %v48
  %v73 = vunpack.c.l.b16 %v49
  %v74 = vpack.c.b16 %v67, %v66
  %v75 = vpack.c.b16 %v69, %v68
  %v76 = vpack.c.b16 %v71, %v70
  %v77 = vpack.c.b16 %v73, %v72
  %v90 = vunpack.c.l.b16 %v50
  %v91 = vunpack.c.l.b16 %v51
  %v92 = vunpack.c.l.b16 %v52
  %v93 = vunpack.c.l.b16 %v53
  %v94 = vunpack.c.l.b16 %v54
  %v95 = vunpack.c.l.b16 %v55
  %v96 = vunpack.c.l.b16 %v56
  %v97 = vunpack.c.l.b16 %v57
  %v98 = vpack.c.b16 %v91, %v90
  %v99 = vpack.c.b16 %v93, %v92
  %v100 = vpack.c.b16 %v95, %v94
  %v101 = vpack.c.b16 %v97, %v96
  %v106 = vld [vmem:[%s1] sm:$0xf]
  %v107 = vld [vmem:[%s1 + $0x4] sm:$0xf]
  %v108 = vld [vmem:[%s1 + $0x8] sm:$0xf]
  %v109 = vld [vmem:[%s1 + $0xc] sm:$0xf]
  %v110 = vld [vmem:[%s1 + $0x10] sm:$0xf]
  %v111 = vld [vmem:[%s1 + $0x14] sm:$0xf]
  %v112 = vld [vmem:[%s1 + $0x18] sm:$0xf]
  %v113 = vld [vmem:[%s1 + $0x1c] sm:$0xf]
  %v114 = vld [vmem:[%s3] sm:$0xf]
  %v115 = vld [vmem:[%s3 + $0x4] sm:$0xf]
  %v116 = vld [vmem:[%s3 + $0x8] sm:$0xf]
  %v117 = vld [vmem:[%s3 + $0xc] sm:$0xf]
  %v118 = vld [vmem:[%s3 + $0x10] sm:$0xf]
  %v119 = vld [vmem:[%s3 + $0x14] sm:$0xf]
  %v120 = vld [vmem:[%s3 + $0x18] sm:$0xf]
  %v121 = vld [vmem:[%s3 + $0x1c] sm:$0xf]
  %v130 = vunpack.c.l.b16 %v106
  %v131 = vunpack.c.l.b16 %v107
  %v132 = vunpack.c.l.b16 %v108
  %v133 = vunpack.c.l.b16 %v109
  %v134 = vunpack.c.l.b16 %v110
  %v135 = vunpack.c.l.b16 %v111
  %v136 = vunpack.c.l.b16 %v112
  %v137 = vunpack.c.l.b16 %v113
  %v138 = vpack.c.b16 %v131, %v130
  %v139 = vpack.c.b16 %v133, %v132
  %v140 = vpack.c.b16 %v135, %v134
  %v141 = vpack.c.b16 %v137, %v136
  %v154 = vunpack.c.l.b16 %v114
  %v155 = vunpack.c.l.b16 %v115
  %v156 = vunpack.c.l.b16 %v116
  %v157 = vunpack.c.l.b16 %v117
  %v158 = vunpack.c.l.b16 %v118
  %v159 = vunpack.c.l.b16 %v119
  %v160 = vunpack.c.l.b16 %v120
  %v161 = vunpack.c.l.b16 %v121
  %v162 = vpack.c.b16 %v155, %v154
  %v163 = vpack.c.b16 %v157, %v156
  %v164 = vpack.c.b16 %v159, %v158
  %v165 = vpack.c.b16 %v161, %v160
  %v170 = vld [vmem:[%s4] sm:$0xf]
  %v171 = vld [vmem:[%s4 + $0x4] sm:$0xf]
  %v172 = vld [vmem:[%s4 + $0x8] sm:$0xf]
  %v173 = vld [vmem:[%s4 + $0xc] sm:$0xf]
  %v174 = vld [vmem:[%s4 + $0x10] sm:$0xf]
  %v175 = vld [vmem:[%s4 + $0x14] sm:$0xf]
  %v176 = vld [vmem:[%s4 + $0x18] sm:$0xf]
  %v177 = vld [vmem:[%s4 + $0x1c] sm:$0xf]
  %v178 = vld [vmem:[%s5] sm:$0xff]
  %v179 = vld [vmem:[%s5 + $0x8] sm:$0xff]
  %v180 = vld [vmem:[%s5 + $0x10] sm:$0xff]
  %v181 = vld [vmem:[%s5 + $0x18] sm:$0xff]
  %v182 = vld [vmem:[%s5 + $0x20] sm:$0xff]
  %v183 = vld [vmem:[%s5 + $0x28] sm:$0xff]
  %v184 = vld [vmem:[%s5 + $0x30] sm:$0xff]
  %v185 = vld [vmem:[%s5 + $0x38] sm:$0xff]
  %187 = vset.pattern.permute.xlu0 0
  %188 = vperm.xlu0 %187, %v178
  %v189 = vpop.permute.xlu0 %188
  %192 = vset.pattern.permute.xlu0 0
  %193 = vperm.xlu0 %192, %v179
  %v194 = vpop.permute.xlu0 %193
  %197 = vset.pattern.permute.xlu0 0
  %198 = vperm.xlu0 %197, %v180
  %v199 = vpop.permute.xlu0 %198
  %202 = vset.pattern.permute.xlu0 0
  %203 = vperm.xlu0 %202, %v181
  %v204 = vpop.permute.xlu0 %203
  %207 = vset.pattern.permute.xlu0 0
  %208 = vperm.xlu0 %207, %v182
  %v209 = vpop.permute.xlu0 %208
  %212 = vset.pattern.permute.xlu0 0
  %213 = vperm.xlu0 %212, %v183
  %v214 = vpop.permute.xlu0 %213
  %217 = vset.pattern.permute.xlu0 0
  %218 = vperm.xlu0 %217, %v184
  %v219 = vpop.permute.xlu0 %218
  %222 = vset.pattern.permute.xlu0 0
  %223 = vperm.xlu0 %222, %v185
  %v224 = vpop.permute.xlu0 %223
  %v234 = vunpack.c.l.b16 %v170
  %v235 = vunpack.c.l.b16 %v171
  %v236 = vunpack.c.l.b16 %v172
  %v237 = vunpack.c.l.b16 %v173
  %v238 = vunpack.c.l.b16 %v174
  %v239 = vunpack.c.l.b16 %v175
  %v240 = vunpack.c.l.b16 %v176
  %v241 = vunpack.c.l.b16 %v177
  %v242 = vpack.c.b16 %v235, %v234
  %v243 = vpack.c.b16 %v237, %v236
  %v244 = vpack.c.b16 %v239, %v238
  %v245 = vpack.c.b16 %v241, %v240
  %250 = vmatprep.subr.bf16.mxu0 0
  %251 = vmatpush1.bf16.msra.mxu0 %v74
  %252 = vmatprep.subr.bf16.mxu0 0
  %253 = vmatpush1.bf16.msra.mxu0 %v75
  %254 = vmatprep.subr.bf16.mxu0 0
  %255 = vmatpush1.bf16.msra.mxu0 %v76
  %256 = vmatprep.subr.bf16.mxu0 0
  %257 = vmatpush1.bf16.msra.mxu0 %v77
  %258 = vmatprep.subr.bf16.mxu0 0
  %259 = vmatpush1.bf16.msra.mxu0 %v98
  %260 = vmatprep.subr.bf16.mxu0 0
  %261 = vmatpush1.bf16.msra.mxu0 %v99
  %262 = vmatprep.subr.bf16.mxu0 0
  %263 = vmatpush1.bf16.msra.mxu0 %v100
  %264 = vmatprep.subr.bf16.mxu0 0
  %265 = vmatpush1.bf16.msra.mxu0 %v101
  %266 = vmatprep.subr.bf16.mxu0 0
  %267 = vmatpush1.bf16.msra.mxu0 0
  %268 = vmatprep.subr.bf16.mxu0 0
  %269 = vmatpush1.bf16.msra.mxu0 0
  %270 = vmatprep.subr.bf16.mxu0 0
  %271 = vmatpush1.bf16.msra.mxu0 0
  %272 = vmatprep.subr.bf16.mxu0 0
  %273 = vmatpush1.bf16.msra.mxu0 0
  %274 = vmatprep.subr.bf16.mxu0 0
  %275 = vmatpush1.bf16.msra.mxu0 0
  %276 = vmatprep.subr.bf16.mxu0 0
  %277 = vmatpush1.bf16.msra.mxu0 0
  %278 = vmatprep.subr.bf16.mxu0 0
  %279 = vmatpush1.bf16.msra.mxu0 0
  %280 = vmatprep.subr.bf16.mxu0 0
  %281 = vmatpush1.bf16.msra.mxu0 0
  %282 = vmatprep.mubr.bf16.mxu0 0
  %283 = vmatmul.mubr.bf16.gmra.mrb[0].mxu0 %v242
  %v284 = vpop.f32.mrb[0].mxu0
  %v285 = vadd.f32 %v189, %v284
  %v286 = vpop.f32.mrb[0].mxu0
  %v287 = vpop.f32.mrb[0].mxu0
  %v288 = vadd.f32 %v194, %v287
  %v289 = vpop.f32.mrb[0].mxu0
  %290 = vmatprep.mubr.bf16.mxu0 0
  %291 = vmatmul.mubr.bf16.gmra.mrb[0].mxu0 %v243
  %v292 = vpop.f32.mrb[0].mxu0
  %v293 = vadd.f32 %v199, %v292
  %v294 = vpop.f32.mrb[0].mxu0
  %v295 = vpop.f32.mrb[0].mxu0
  %v296 = vadd.f32 %v204, %v295
  %v297 = vpop.f32.mrb[0].mxu0
  %298 = vmatprep.mubr.bf16.mxu0 0
  %299 = vmatmul.mubr.bf16.gmra.mrb[0].mxu0 %v244
  %v300 = vpop.f32.mrb[0].mxu0
  %v301 = vadd.f32 %v209, %v300
  %v302 = vpop.f32.mrb[0].mxu0
  %v303 = vpop.f32.mrb[0].mxu0
  %v304 = vadd.f32 %v214, %v303
  %v305 = vpop.f32.mrb[0].mxu0
  %306 = vmatprep.mubr.bf16.mxu0 0
  %307 = vmatmul.mubr.bf16.gmra.mrb[0].mxu0 %v245
  %v308 = vpop.f32.mrb[0].mxu0
  %v309 = vadd.f32 %v219, %v308
  %v310 = vpop.f32.mrb[0].mxu0
  %v311 = vpop.f32.mrb[0].mxu0
  %v312 = vadd.f32 %v224, %v311
  %v313 = vpop.f32.mrb[0].mxu0
  %314 = vdwg.mxu0
  %v315 = vmax.f32 %v285, 0.0
  %v316 = vmax.f32 %v288, 0.0
  %v317 = vmax.f32 %v293, 0.0
  %v318 = vmax.f32 %v296, 0.0
  %v319 = vmax.f32 %v301, 0.0
  %v320 = vmax.f32 %v304, 0.0
  %v321 = vmax.f32 %v309, 0.0
  %v322 = vmax.f32 %v312, 0.0
  %323 = vmatprep.subr.bf16.mxu0 0
  %324 = vmatpush1.bf16.msra.mxu0 %v138
  %325 = vmatprep.subr.bf16.mxu0 0
  %326 = vmatpush1.bf16.msra.mxu0 %v139
  %327 = vmatprep.subr.bf16.mxu0 0
  %328 = vmatpush1.bf16.msra.mxu0 %v140
  %329 = vmatprep.subr.bf16.mxu0 0
  %330 = vmatpush1.bf16.msra.mxu0 %v141
  %331 = vmatprep.subr.bf16.mxu0 0
  %332 = vmatpush1.bf16.msra.mxu0 %v162
  %333 = vmatprep.subr.bf16.mxu0 0
  %334 = vmatpush1.bf16.msra.mxu0 %v163
  %335 = vmatprep.subr.bf16.mxu0 0
  %336 = vmatpush1.bf16.msra.mxu0 %v164
  %337 = vmatprep.subr.bf16.mxu0 0
  %338 = vmatpush1.bf16.msra.mxu0 %v165
  %339 = vmatprep.subr.bf16.mxu0 0
  %340 = vmatpush1.bf16.msra.mxu0 0
  %341 = vmatprep.subr.bf16.mxu0 0
  %342 = vmatpush1.bf16.msra.mxu0 0
  %343 = vmatprep.subr.bf16.mxu0 0
  %344 = vmatpush1.bf16.msra.mxu0 0
  %345 = vmatprep.subr.bf16.mxu0 0
  %346 = vmatpush1.bf16.msra.mxu0 0
  %347 = vmatprep.subr.bf16.mxu0 0
  %348 = vmatpush1.bf16.msra.mxu0 0
  %349 = vmatprep.subr.bf16.mxu0 0
  %350 = vmatpush1.bf16.msra.mxu0 0
  %351 = vmatprep.subr.bf16.mxu0 0
  %352 = vmatpush1.bf16.msra.mxu0 0
  %353 = vmatprep.subr.bf16.mxu0 0
  %354 = vmatpush1.bf16.msra.mxu0 0
  %355 = vmatprep.mubr.bf16.mxu0 0
  %356 = vmatmul.mubr.bf16.gmra.mrb[0].mxu0 %v242
  %v357 = vpop.f32.mrb[0].mxu0
  %v358 = vadd.f32 %v189, %v357
  %v359 = vpop.f32.mrb[0].mxu0
  %v360 = vpop.f32.mrb[0].mxu0
  %v361 = vadd.f32 %v194, %v360
  %v362 = vpop.f32.mrb[0].mxu0
  %363 = vmatprep.mubr.bf16.mxu0 0
  %364 = vmatmul.mubr.bf16.gmra.mrb[0].mxu0 %v243
  %v365 = vpop.f32.mrb[0].mxu0
  %v366 = vadd.f32 %v199, %v365
  %v367 = vpop.f32.mrb[0].mxu0
  %v368 = vpop.f32.mrb[0].mxu0
  %v369 = vadd.f32 %v204, %v368
  %v370 = vpop.f32.mrb[0].mxu0
  %371 = vmatprep.mubr.bf16.mxu0 0
  %372 = vmatmul.mubr.bf16.gmra.mrb[0].mxu0 %v244
  %v373 = vpop.f32.mrb[0].mxu0
  %v374 = vadd.f32 %v209, %v373
  %v375 = vpop.f32.mrb[0].mxu0
  %v376 = vpop.f32.mrb[0].mxu0
  %v377 = vadd.f32 %v214, %v376
  %v378 = vpop.f32.mrb[0].mxu0
  %379 = vmatprep.mubr.bf16.mxu0 0
  %380 = vmatmul.mubr.bf16.gmra.mrb[0].mxu0 %v245
  %v381 = vpop.f32.mrb[0].mxu0
  %v382 = vadd.f32 %v219, %v381
  %v383 = vpop.f32.mrb[0].mxu0
  %v384 = vpop.f32.mrb[0].mxu0
  %v385 = vadd.f32 %v224, %v384
  %v386 = vpop.f32.mrb[0].mxu0
  %387 = vdwg.mxu0
  %v388 = vmax.f32 %v358, 0.0
  %v389 = vmax.f32 %v361, 0.0
  %v390 = vmax.f32 %v366, 0.0
  %v391 = vmax.f32 %v369, 0.0
  %v392 = vmax.f32 %v374, 0.0
  %v393 = vmax.f32 %v377, 0.0
  %v394 = vmax.f32 %v382, 0.0
  %v395 = vmax.f32 %v385, 0.0
  %v396 = vsub.f32 %v315, %v388
  %v397 = vsub.f32 %v316, %v389
  %v398 = vsub.f32 %v317, %v390
  %v399 = vsub.f32 %v318, %v391
  %v400 = vsub.f32 %v319, %v392
  %v401 = vsub.f32 %v320, %v393
  %v402 = vsub.f32 %v321, %v394
  %v403 = vsub.f32 %v322, %v395
  %v404 = vand.u32 2147483647, %v396
  %v405 = vand.u32 2147483647, %v397
  %v406 = vand.u32 2147483647, %v398
  %v407 = vand.u32 2147483647, %v399
  %v408 = vand.u32 2147483647, %v400
  %v409 = vand.u32 2147483647, %v401
  %v410 = vand.u32 2147483647, %v402
  %v411 = vand.u32 2147483647, %v403
  %v412 = vld [vmem:[%s6] sm:$0xf]
  %v413 = vld [vmem:[%s6 + $0x4] sm:$0xf]
  %v414 = vld [vmem:[%s6 + $0x8] sm:$0xf]
  %v415 = vld [vmem:[%s6 + $0xc] sm:$0xf]
  %v416 = vpack.c.bf16 %v405, %v404
  %v417 = vpack.c.bf16 %v407, %v406
  %v418 = vpack.c.bf16 %v409, %v408
  %v419 = vpack.c.bf16 %v411, %v410
  %v420 = vld [vmem:[%s7] sm:$0xff]
  %v421 = vld [vmem:[%s7 + $0x8] sm:$0xff]
  %v422 = vld [vmem:[%s7 + $0x10] sm:$0xff]
  %v423 = vld [vmem:[%s7 + $0x18] sm:$0xff]
  %425 = vset.pattern.permute.xlu0 0
  %426 = vperm.xlu0 %425, %v420
  %v427 = vpop.permute.xlu0 %426
  %430 = vset.pattern.permute.xlu0 0
  %431 = vperm.xlu0 %430, %v421
  %v432 = vpop.permute.xlu0 %431
  %435 = vset.pattern.permute.xlu0 0
  %436 = vperm.xlu0 %435, %v422
  %v437 = vpop.permute.xlu0 %436
  %440 = vset.pattern.permute.xlu0 0
  %441 = vperm.xlu0 %440, %v423
  %v442 = vpop.permute.xlu0 %441
  %v448 = vunpack.c.l.b16 %v412
  %v449 = vunpack.c.l.b16 %v413
  %v450 = vunpack.c.l.b16 %v414
  %v451 = vunpack.c.l.b16 %v415
  %v452 = vpack.c.b16 %v449, %v448
  %v453 = vpack.c.b16 %v451, %v450
  %vm454 = vcmask 523264
  %v456 = vsel %vm454, %v452, 0
  %v459 = vsel %vm454, %v453, 0
  %461 = vmatprep.subr.bf16.mxu0 0
  %462 = vmatpush1.bf16.msra.mxu0 %v416
  %463 = vmatprep.subr.bf16.mxu0 0
  %464 = vmatpush1.bf16.msra.mxu0 %v417
  %465 = vmatprep.subr.bf16.mxu0 0
  %466 = vmatpush1.bf16.msra.mxu0 %v418
  %467 = vmatprep.subr.bf16.mxu0 0
  %468 = vmatpush1.bf16.msra.mxu0 %v419
  %469 = vmatprep.subr.bf16.mxu0 0
  %470 = vmatpush1.bf16.msra.mxu0 0
  %471 = vmatprep.subr.bf16.mxu0 0
  %472 = vmatpush1.bf16.msra.mxu0 0
  %473 = vmatprep.subr.bf16.mxu0 0
  %474 = vmatpush1.bf16.msra.mxu0 0
  %475 = vmatprep.subr.bf16.mxu0 0
  %476 = vmatpush1.bf16.msra.mxu0 0
  %477 = vmatprep.subr.bf16.mxu0 0
  %478 = vmatpush1.bf16.msra.mxu0 0
  %479 = vmatprep.subr.bf16.mxu0 0
  %480 = vmatpush1.bf16.msra.mxu0 0
  %481 = vmatprep.subr.bf16.mxu0 0
  %482 = vmatpush1.bf16.msra.mxu0 0
  %483 = vmatprep.subr.bf16.mxu0 0
  %484 = vmatpush1.bf16.msra.mxu0 0
  %485 = vmatprep.subr.bf16.mxu0 0
  %486 = vmatpush1.bf16.msra.mxu0 0
  %487 = vmatprep.subr.bf16.mxu0 0
  %488 = vmatpush1.bf16.msra.mxu0 0
  %489 = vmatprep.subr.bf16.mxu0 0
  %490 = vmatpush1.bf16.msra.mxu0 0
  %491 = vmatprep.subr.bf16.mxu0 0
  %492 = vmatpush1.bf16.msra.mxu0 0
  %493 = vmatprep.mubr.bf16.mxu0 0
  %494 = vmatmul.mubr.bf16.gmra.mrb[0].mxu0 %v456
  %v495 = vpop.f32.mrb[0].mxu0
  %v496 = vadd.f32 %v427, %v495
  %v497 = vpop.f32.mrb[0].mxu0
  %v498 = vpop.f32.mrb[0].mxu0
  %v499 = vadd.f32 %v432, %v498
  %v500 = vpop.f32.mrb[0].mxu0
  %501 = vmatprep.mubr.bf16.mxu0 0
  %502 = vmatmul.mubr.bf16.gmra.mrb[0].mxu0 %v459
  %v503 = vpop.f32.mrb[0].mxu0
  %v504 = vadd.f32 %v437, %v503
  %v505 = vpop.f32.mrb[0].mxu0
  %v506 = vpop.f32.mrb[0].mxu0
  %v507 = vadd.f32 %v442, %v506
  %v508 = vpop.f32.mrb[0].mxu0
  %509 = vdwg.mxu0
  %v510 = vmax.f32 %v496, 0.0
  %v511 = vmax.f32 %v499, 0.0
  %v512 = vmax.f32 %v504, 0.0
  %v513 = vmax.f32 %v507, 0.0
  %v514 = vsel %vm454, %v510, 0.0
  %515 = vadd.xlane.f32.xlu0 %v514
  %v516 = vpop.xlane.xlu0 %515
  %v517 = vsel %vm454, %v511, 0.0
  %518 = vadd.xlane.f32.xlu0 %v517
  %v519 = vpop.xlane.xlu0 %518
  %v520 = vsel %vm454, %v512, 0.0
  %521 = vadd.xlane.f32.xlu0 %v520
  %v522 = vpop.xlane.xlu0 %521
  %v523 = vsel %vm454, %v513, 0.0
  %524 = vadd.xlane.f32.xlu0 %v523
  %v525 = vpop.xlane.xlu0 %524
  %v526 = vrcp.pop 64.0
  %v527 = vmul.f32 %v516, %v526
  %v528 = vmul.f32 %v519, %v526
  %v529 = vmul.f32 %v522, %v526
  %v530 = vmul.f32 %v525, %v526
  %vm531 = vcmask 7168
  %v532 = vsel %vm531, %v527, %v529
  %v533 = vsel %vm531, %v528, %v530
  %v534 = vld [vmem:[%s8] sm:$0xff]
  %v535 = vld [vmem:[%s8 + $0x8] sm:$0xff]
  %v536 = vld [vmem:[%s8 + $0x10] sm:$0xff]
  %v537 = vld [vmem:[%s8 + $0x18] sm:$0xff]
  %v538 = vld [vmem:[%s9] sm:$0xff]
  %v539 = vld [vmem:[%s9 + $0x8] sm:$0xff]
  %v540 = vld [vmem:[%s9 + $0x10] sm:$0xff]
  %v541 = vld [vmem:[%s9 + $0x18] sm:$0xff]
  %543 = vset.pattern.permute.xlu0 0
  %544 = vperm.xlu0 %543, %v538
  %v545 = vpop.permute.xlu0 %544
  %548 = vset.pattern.permute.xlu0 0
  %549 = vperm.xlu0 %548, %v539
  %v550 = vpop.permute.xlu0 %549
  %553 = vset.pattern.permute.xlu0 0
  %554 = vperm.xlu0 %553, %v540
  %v555 = vpop.permute.xlu0 %554
  %558 = vset.pattern.permute.xlu0 0
  %559 = vperm.xlu0 %558, %v541
  %v560 = vpop.permute.xlu0 %559
  %vm562 = vcmask 130048
  %v564 = vsel %vm562, %v534, 0
  %v567 = vsel %vm562, %v535, 0
  %v570 = vsel %vm562, %v536, 0
  %v573 = vsel %vm562, %v537, 0
  %575 = vmatprep.subr.mxu0 0.0
  %576 = vmatpush1.msra.mxu0 %v532
  %577 = vmatprep.subr.mxu0 0.0
  %578 = vmatpush1.msra.mxu0 %v533
  %579 = vmatprep.subr.mxu0 0.0
  %580 = vmatpush1.msra.mxu0 0.0
  %581 = vmatprep.subr.mxu0 0.0
  %582 = vmatpush1.msra.mxu0 0.0
  %583 = vmatprep.subr.mxu0 0.0
  %584 = vmatpush1.msra.mxu0 0.0
  %585 = vmatprep.subr.mxu0 0.0
  %586 = vmatpush1.msra.mxu0 0.0
  %587 = vmatprep.subr.mxu0 0.0
  %588 = vmatpush1.msra.mxu0 0.0
  %589 = vmatprep.subr.mxu0 0.0
  %590 = vmatpush1.msra.mxu0 0.0
  %591 = vmatprep.subr.mxu0 0.0
  %592 = vmatpush1.msra.mxu0 0.0
  %593 = vmatprep.subr.mxu0 0.0
  %594 = vmatpush1.msra.mxu0 0.0
  %595 = vmatprep.subr.mxu0 0.0
  %596 = vmatpush1.msra.mxu0 0.0
  %597 = vmatprep.subr.mxu0 0.0
  %598 = vmatpush1.msra.mxu0 0.0
  %599 = vmatprep.subr.mxu0 0.0
  %600 = vmatpush1.msra.mxu0 0.0
  %601 = vmatprep.subr.mxu0 0.0
  %602 = vmatpush1.msra.mxu0 0.0
  %603 = vmatprep.subr.mxu0 0.0
  %604 = vmatpush1.msra.mxu0 0.0
  %605 = vmatprep.subr.mxu0 0.0
  %606 = vmatpush1.msra.mxu0 0.0
  %607 = vmatprep.subr.mxu0 0.0
  %608 = vmatpush1.msra.mxu0 0.0
  %609 = vmatprep.subr.mxu0 0.0
  %610 = vmatpush1.msra.mxu0 0.0
  %611 = vmatprep.subr.mxu0 0.0
  %612 = vmatpush1.msra.mxu0 0.0
  %613 = vmatprep.subr.mxu0 0.0
  %614 = vmatpush1.msra.mxu0 0.0
  %615 = vmatprep.subr.mxu0 0.0
  %616 = vmatpush1.msra.mxu0 0.0
  %617 = vmatprep.subr.mxu0 0.0
  %618 = vmatpush1.msra.mxu0 0.0
  %619 = vmatprep.subr.mxu0 0.0
  %620 = vmatpush1.msra.mxu0 0.0
  %621 = vmatprep.subr.mxu0 0.0
  %622 = vmatpush1.msra.mxu0 0.0
  %623 = vmatprep.subr.mxu0 0.0
  %624 = vmatpush1.msra.mxu0 0.0
  %625 = vmatprep.subr.mxu0 0.0
  %626 = vmatpush1.msra.mxu0 0.0
  %627 = vmatprep.subr.mxu0 0.0
  %628 = vmatpush1.msra.mxu0 0.0
  %629 = vmatprep.subr.mxu0 0.0
  %630 = vmatpush1.msra.mxu0 0.0
  %631 = vmatprep.subr.mxu0 0.0
  %632 = vmatpush1.msra.mxu0 0.0
  %633 = vmatprep.subr.mxu0 0.0
  %634 = vmatpush1.msra.mxu0 0.0
  %635 = vmatprep.subr.mxu0 0.0
  %636 = vmatpush1.msra.mxu0 0.0
  %637 = vmatprep.subr.mxu0 0.0
  %638 = vmatpush1.msra.mxu0 0.0
  %639 = vmatprep.mubr.f32.mxu0 0.0
  %640 = vmatmul.mubr.f32.gmra.mrb[0].mxu0 %v564
  %v641 = vpop.f32.mrb[0].mxu0
  %v642 = vadd.f32 %v545, %v641
  %v643 = vpop.f32.mrb[0].mxu0
  %644 = vmatprep.mubr.f32.mxu0 0.0
  %645 = vmatmul.mubr.f32.gmra.mrb[0].mxu0 %v567
  %v646 = vpop.f32.mrb[0].mxu0
  %v647 = vadd.f32 %v550, %v646
  %v648 = vpop.f32.mrb[0].mxu0
  %649 = vmatprep.mubr.f32.mxu0 0.0
  %650 = vmatmul.mubr.f32.gmra.mrb[0].mxu0 %v570
  %v651 = vpop.f32.mrb[0].mxu0
  %v652 = vadd.f32 %v555, %v651
  %v653 = vpop.f32.mrb[0].mxu0
  %654 = vmatprep.mubr.f32.mxu0 0.0
  %655 = vmatmul.mubr.f32.gmra.mrb[0].mxu0 %v573
  %v656 = vpop.f32.mrb[0].mxu0
  %v657 = vadd.f32 %v560, %v656
  %v658 = vpop.f32.mrb[0].mxu0
  %659 = vdwg.mxu0
  %v660 = vmax.f32 %v642, 0.0
  %v661 = vmax.f32 %v647, 0.0
  %v662 = vmax.f32 %v652, 0.0
  %v663 = vmax.f32 %v657, 0.0
  %v664 = vld [vmem:[%s10] sm:$0x3]
  %v665 = vld [vmem:[%s11] sm:$0x3]
  %667 = vset.pattern.permute.xlu0 0
  %668 = vperm.xlu0 %667, %v665
  %v669 = vpop.permute.xlu0 %668
  %vm671 = vcmask 261120
  %v673 = vsel %vm671, %v664, 0
  %675 = vmatprep.subr.mxu0 0.0
  %676 = vmatpush1.msra.mxu0 %v660
  %677 = vmatprep.subr.mxu0 0.0
  %678 = vmatpush1.msra.mxu0 %v661
  %679 = vmatprep.subr.mxu0 0.0
  %680 = vmatpush1.msra.mxu0 %v662
  %681 = vmatprep.subr.mxu0 0.0
  %682 = vmatpush1.msra.mxu0 %v663
  %683 = vmatprep.subr.mxu0 0.0
  %684 = vmatpush1.msra.mxu0 0.0
  %685 = vmatprep.subr.mxu0 0.0
  %686 = vmatpush1.msra.mxu0 0.0
  %687 = vmatprep.subr.mxu0 0.0
  %688 = vmatpush1.msra.mxu0 0.0
  %689 = vmatprep.subr.mxu0 0.0
  %690 = vmatpush1.msra.mxu0 0.0
  %691 = vmatprep.subr.mxu0 0.0
  %692 = vmatpush1.msra.mxu0 0.0
  %693 = vmatprep.subr.mxu0 0.0
  %694 = vmatpush1.msra.mxu0 0.0
  %695 = vmatprep.subr.mxu0 0.0
  %696 = vmatpush1.msra.mxu0 0.0
  %697 = vmatprep.subr.mxu0 0.0
  %698 = vmatpush1.msra.mxu0 0.0
  %699 = vmatprep.subr.mxu0 0.0
  %700 = vmatpush1.msra.mxu0 0.0
  %701 = vmatprep.subr.mxu0 0.0
  %702 = vmatpush1.msra.mxu0 0.0
  %703 = vmatprep.subr.mxu0 0.0
  %704 = vmatpush1.msra.mxu0 0.0
  %705 = vmatprep.subr.mxu0 0.0
  %706 = vmatpush1.msra.mxu0 0.0
  %707 = vmatprep.subr.mxu0 0.0
  %708 = vmatpush1.msra.mxu0 0.0
  %709 = vmatprep.subr.mxu0 0.0
  %710 = vmatpush1.msra.mxu0 0.0
  %711 = vmatprep.subr.mxu0 0.0
  %712 = vmatpush1.msra.mxu0 0.0
  %713 = vmatprep.subr.mxu0 0.0
  %714 = vmatpush1.msra.mxu0 0.0
  %715 = vmatprep.subr.mxu0 0.0
  %716 = vmatpush1.msra.mxu0 0.0
  %717 = vmatprep.subr.mxu0 0.0
  %718 = vmatpush1.msra.mxu0 0.0
  %719 = vmatprep.subr.mxu0 0.0
  %720 = vmatpush1.msra.mxu0 0.0
  %721 = vmatprep.subr.mxu0 0.0
  %722 = vmatpush1.msra.mxu0 0.0
  %723 = vmatprep.subr.mxu0 0.0
  %724 = vmatpush1.msra.mxu0 0.0
  %725 = vmatprep.subr.mxu0 0.0
  %726 = vmatpush1.msra.mxu0 0.0
  %727 = vmatprep.subr.mxu0 0.0
  %728 = vmatpush1.msra.mxu0 0.0
  %729 = vmatprep.subr.mxu0 0.0
  %730 = vmatpush1.msra.mxu0 0.0
  %731 = vmatprep.subr.mxu0 0.0
  %732 = vmatpush1.msra.mxu0 0.0
  %733 = vmatprep.subr.mxu0 0.0
  %734 = vmatpush1.msra.mxu0 0.0
  %735 = vmatprep.subr.mxu0 0.0
  %736 = vmatpush1.msra.mxu0 0.0
  %737 = vmatprep.subr.mxu0 0.0
  %738 = vmatpush1.msra.mxu0 0.0
  %739 = vmatprep.mubr.f32.mxu0 0.0
  %740 = vmatmul.mubr.f32.gmra.mrb[0].mxu0 %v673
  %v741 = vpop.f32.mrb[0].mxu0
  %v742 = vadd.f32 %v669, %v741
  %v743 = vpop.f32.mrb[0].mxu0
  %744 = vdwg.mxu0
  %vm745 = vcmask 9216
  %746 = vst.msk [vmem:[%s12] sm:$0x3] %vm745, %v742
  // Predicated region
  $region50: #{cd_net_forward.1} parent=0 // pred_check
    _
  $region51: #{cd_net_forward.1} parent=0 // pred_check_branch
    %748 = sbr.rel (0) target = $region53
  $region52: #{cd_net_forward.1} parent=0 // pred_region
    _
  $region53: #{cd_net_forward.1} parent=0 // pred_fallthru
    _
  // Predicated region
  $region54: #{cd_net_forward.1} parent=0 // pred_check
    _
  $region55: #{cd_net_forward.1} parent=0 // pred_check_branch
    %750 = sbr.rel (0) target = $region57
  $region56: #{cd_net_forward.1} parent=0 // pred_region
    _
  $region57: #{cd_net_forward.1} parent=0 // pred_fallthru
    _

</llo_original>
